<compile_context>
chip_gen: v7x
topology: tpu7x:2x2x1
jax: 0.10.0
libtpu: 0.0.40
codegen_flags: <defaults>
</compile_context>

<pallas_src>
import jax
import jax.numpy as jnp
from jax.experimental import pallas as pl
from jax.experimental.pallas import tpu as pltpu

_LANE = 128
_TARGET_BLOCK_BYTES = 4 << 20  # ~4 MiB blocks: <10% step overhead on v7x HBM,
                               # still ~16-24 MiB pipelined (fits every gen).


def _scale_kernel(x_ref, s_ref, o_ref):
    # x_ref: (blk_r, blk_t) tile of the lane-dense view of x
    # s_ref: (blk_r, 1) per-row scale (main path)  OR  (blk_r, blk_t) per-element
    #        scale (lane-repacked small-T path).  Scale stays f32 so the multiply
    #        is f32; the lane splat of the (blk_r, 1) operand rides otherwise-idle
    #        VPU slots in this HBM-bound kernel (do NOT pre-broadcast it in HBM).
    o_ref[...] = (x_ref[...] * s_ref[...]).astype(o_ref.dtype)


def _sublane_multiple(dtype):
    # Sub-32-bit dtypes pack along sublanes: 8 for f32, 16 for bf16, 32 for i8/fp8.
    return max(8, 32 // jnp.dtype(dtype).itemsize)


def _round_up(x, m):
    return ((x + m - 1) // m) * m


def _choose_tiles(rows, width, itemsize, sub, target_bytes=_TARGET_BLOCK_BYTES):
    """Pick (blk_r, blk_t), preferring full-row (fully contiguous DMA) blocks."""
    if width * sub * itemsize <= target_bytes:
        # Full rows fit the budget -> blk_t == width, grow blk_r up to the budget.
        blk_t = width
        if rows * width * itemsize <= target_bytes:
            blk_r = rows
        else:
            blk_r = max(sub, (target_bytes // (width * itemsize)) // sub * sub)
            blk_r = min(blk_r, rows)
    else:
        # Even one sublane-group of full rows blows the budget: split the T axis.
        blk_r = min(rows, sub)
        blk_t = max(_LANE, (target_bytes // (blk_r * itemsize)) // _LANE * _LANE)
        blk_t = min(blk_t, width)
    # Megacore (v7x has 2 TCs): guarantee >= 2 programs on a "parallel" axis so
    # both TensorCores stream; costs one extra (cheap) step on 1-TC v5e/v6e.
    if pl.cdiv(rows, blk_r) * pl.cdiv(width, blk_t) == 1 and rows >= 2 * sub:
        blk_r = min(blk_r, _round_up(pl.cdiv(rows, 2), sub))
    return blk_r, blk_t


def _run_scale(x2, scale2):
    """x2: (R, W) lane-dense view of x; scale2: (R, 1) or (R, W), f32."""
    R, W = x2.shape
    itemsize = jnp.dtype(x2.dtype).itemsize
    sub = _sublane_multiple(x2.dtype)
    blk_r, blk_t = _choose_tiles(R, W, itemsize, sub)

    # Grid order (rows, W): W/T axis innermost, so the (blk_r, 1) scale block
    # index is constant across the inner loop and is not re-DMA'd per step.
    grid = (pl.cdiv(R, blk_r), pl.cdiv(W, blk_t))

    per_row_scale = scale2.shape[1] == 1
    if per_row_scale:
        s_spec = pl.BlockSpec((blk_r, 1), lambda i, j: (i, 0))
    else:
        s_spec = pl.BlockSpec((blk_r, blk_t), lambda i, j: (i, j))

    return pl.pallas_call(
        _scale_kernel,
        out_shape=jax.ShapeDtypeStruct((R, W), x2.dtype),
        grid_spec=pltpu.PrefetchScalarGridSpec(
            num_scalar_prefetch=0,
            grid=grid,
            in_specs=[
                pl.BlockSpec((blk_r, blk_t), lambda i, j: (i, j)),
                s_spec,
            ],
            out_specs=pl.BlockSpec((blk_r, blk_t), lambda i, j: (i, j)),
        ),
        compiler_params=pltpu.CompilerParams(
            dimension_semantics=("parallel", "parallel"),
            vmem_limit_bytes=32 * 1024 * 1024,
        ),
        # In-place on the x view: halves the HBM footprint (not traffic).
        input_output_aliases={0: 0},
        cost_estimate=pl.CostEstimate(
            flops=R * W,
            transcendentals=0,
            bytes_accessed=2 * R * W * itemsize + int(scale2.size) * 4,
        ),
    )(x2, scale2)


def scale_forward(x, mask, noise, sigma=0.5):
    """Pallas implementation of Scale.forward.

    x:     (B, C, T) float
    mask:  (B, 1, 1) float in {0, 1}  (bernoulli(p) gate)
    noise: (B, C, 1) float            (gaussian)
    returns x * (mask * noise * sigma + 1)
    """
    B, C, T = x.shape
    rows = B * C

    # Fold the gate/noise/sigma into a single per-row scale (wrapper glue,
    # O(B*C) vs the kernel's O(B*C*T)).  Keep it f32 so the in-kernel multiply
    # happens in f32 (matches torch bool*f32*f32+1 promotion).
    scale = (
        mask.astype(jnp.float32) * noise.astype(jnp.float32) * sigma + 1.0
    ).reshape(rows, 1)

    if T % _LANE == 0:
        # Main path: lane-dense (rows, T) view + per-row (rows, 1) scale.
        out2 = _run_scale(x.reshape(rows, T), scale)
        return out2.reshape(B, C, T)

    # Small / non-128-multiple T: repack all elements along lanes so every
    # vector store is a full, unmasked vreg.  The scale must be expanded per
    # element for this layout (extra scale read traffic, but far cheaper than
    # masked 16-wide partial stores or 8x lane padding for shapes like T=16).
    n = rows * T
    n_pad = _round_up(n, _LANE)
    x_flat = x.reshape(n)
    s_flat = jnp.broadcast_to(scale, (rows, T)).reshape(n)
    if n_pad != n:
        x_flat = jnp.pad(x_flat, (0, n_pad - n))
        s_flat = jnp.pad(s_flat, (0, n_pad - n))
    x2 = x_flat.reshape(n_pad // _LANE, _LANE)
    s2 = s_flat.reshape(n_pad // _LANE, _LANE)
    out2 = _run_scale(x2, s2)
    return out2.reshape(n_pad)[:n].reshape(B, C, T)


if __name__ == "__main__":
    sigma = 0.5
    p = 0.5
    key = jax.random.PRNGKey(0)

    def run_case(B, C, T):
        kx, kmask, knoise = jax.random.split(jax.random.fold_in(key, T), 3)
        x = jax.random.normal(kx, (B, C, T), dtype=jnp.float32)
        # mask: uniform < p, cast bool -> float (matches torch bool promotion)
        mask = (jax.random.uniform(kmask, (B, 1, 1)) < p).astype(jnp.float32)
        noise = jax.random.normal(knoise, (B, C, 1), dtype=jnp.float32)

        out = jax.block_until_ready(scale_forward(x, mask, noise, sigma=sigma))

        ref = x * (mask * noise * sigma + 1.0)
        assert out.shape == x.shape and out.dtype == x.dtype
        assert jnp.allclose(out, ref, atol=1e-6, rtol=1e-6), f"mismatch (T={T})"

    # Module-typical small shape (T=16 -> lane-repacked path).
    run_case(2, 4, 16)
    # Lane-aligned shape (T=256 -> full-row contiguous path).
    run_case(2, 4, 256)

    print("KERNEL_OK")
</pallas_src>

<mosaic_0001>
module attributes {stable_mosaic.version = 11 : i64} {
  func.func @_scale_kernel(%arg0: i32, %arg1: i32, %arg2: memref<1x128xf32, #tpu.memory_space<vmem>>, %arg3: memref<1x128xf32, #tpu.memory_space<vmem>>, %arg4: memref<1x128xf32, #tpu.memory_space<vmem>>) attributes {dimension_semantics = [#tpu.dimension_semantics<parallel>, #tpu.dimension_semantics<parallel>], iteration_bounds = array<i64: 1, 1>, scalar_prefetch = 0 : i64, scratch_operands = 0 : i64, tpu.core_type = #tpu.core_type<tc>, window_params = [{transform_indices = @transform_0, window_bounds = array<i64: 1, 128>}, {transform_indices = @transform_1, window_bounds = array<i64: 1, 128>}, {transform_indices = @transform_2, window_bounds = array<i64: 1, 128>}]} {
    %c0 = arith.constant 0 : index
    %c0_0 = arith.constant 0 : index
    %0 = vector.load %arg2[%c0, %c0_0] : memref<1x128xf32, #tpu.memory_space<vmem>>, vector<1x128xf32>
    %c0_1 = arith.constant 0 : index
    %c0_2 = arith.constant 0 : index
    %1 = vector.load %arg3[%c0_1, %c0_2] : memref<1x128xf32, #tpu.memory_space<vmem>>, vector<1x128xf32>
    %2 = arith.mulf %0, %1 : vector<1x128xf32>
    %c0_3 = arith.constant 0 : index
    %c0_4 = arith.constant 0 : index
    %3 = vector.load %arg4[%c0_3, %c0_4] : memref<1x128xf32, #tpu.memory_space<vmem>>, vector<1x128xf32>
    tpu.vector_store %arg4[%c0_3, %c0_4], %2 {strides = array<i32>} : memref<1x128xf32, #tpu.memory_space<vmem>>, vector<1x128xf32>,
    return
  }
  func.func @transform_0(%arg0: i32, %arg1: i32) -> (i32, i32) {
    %c0_i32 = arith.constant 0 : i32
    return %arg0, %arg1 : i32, i32
  }
  func.func @transform_1(%arg0: i32, %arg1: i32) -> (i32, i32) {
    %c0_i32 = arith.constant 0 : i32
    return %arg0, %arg1 : i32, i32
  }
  func.func @transform_2(%arg0: i32, %arg1: i32) -> (i32, i32) {
    %c0_i32 = arith.constant 0 : i32
    return %arg0, %arg1 : i32, i32
  }
}

</mosaic_0001>

<llo_original>
// kernel: tpu_custom_call.1
$region0: #{tpu_custom_call.1}
  #allocation0 [shape = 'u32[]', space=smem, size = 0x4, offset = 0x4, fixed_abs, tag = 'smem constant byte address 0x4 - core index']
  #allocation1 [shape = 'u32[144,128]{1,0:T(1,128)}', space=vmem, size = 0x12000, scoped, tag = 'internal scratch']
  %s0 = inlined_call_operand.hbm [shape: f32[1,128], index: 0, kind: input, shape index: {}, may-alias: {0,2}]
  %s1 = inlined_call_operand.vmem [shape: f32[1,128], index: 1, kind: input, shape index: {}]
  %s2 = inlined_call_operand.hbm [shape: f32[1,128], index: 2, kind: output, shape index: {}, may-alias: {0,2}]
  %s3 = sld [smem:[#allocation0]]
  $region22: #{tpu_custom_call.1} parent=0
    _
  %s5 = ssub.s32 1, %s3
  %s6 = scalar_select 0, %s5, %s3
  $region1: #{tpu_custom_call.1} parent=0
    #allocation2 [shape = 'u8[512]{0}', space=vmem, size = 0x400, scoped, tag = 'input window, operand 0, single buffered']
    #allocation3 [shape = 's32[1]{0}', space=sflag, size = 0x4, scoped, tag = 'scoped memory for tpu_custom_call.1']
    #allocation4 [shape = 's32[1]{0}', space=sflag, size = 0x4, scoped, tag = 'scoped memory for tpu_custom_call.1']
    #allocation5 [shape = 'u8[512]{0}', space=vmem, size = 0x400, scoped, tag = 'output window, operand 0, single buffered']
    %7 = vsyncpa [#allocation3], 0
    %8 = vsyncpa [#allocation4], 0
    // Predicated region
    $region2: #{tpu_custom_call.1} parent=1 // pred_check
      _
    $region3: #{tpu_custom_call.1} parent=1 // pred_check_branch
      %10 = sbr.rel (0) target = $region5
    $region4: #{tpu_custom_call.1} parent=1 // pred_region
      %s12 = ssub.s32 16, 16
      %13 = vsyncadd [#allocation3], %s12
      %s15 = sshll.u32 [#allocation2], 4
      %s16 = int_to_ptr.vmem [resolvable:$true] %s15
      %18 = dma.hbm_to_vmem [thread:$0]  %s0, 16, %s16, [#allocation3]
    $region5: #{tpu_custom_call.1} parent=1 // pred_fallthru
      _
    // Predicated region
    $region6: #{tpu_custom_call.1} parent=1 // pred_check
      _
    $region7: #{tpu_custom_call.1} parent=1 // pred_check_branch
      %20 = sbr.rel (0) target = $region9
    $region8: #{tpu_custom_call.1} parent=1 // pred_region
      _
    $region9: #{tpu_custom_call.1} parent=1 // pred_fallthru
      _
    // Predicated region
    $region10: #{tpu_custom_call.1} parent=1 // pred_check
      _
    $region11: #{tpu_custom_call.1} parent=1 // pred_check_branch
      %22 = sbr.rel (0) target = $region13
    $region12: #{tpu_custom_call.1} parent=1 // pred_region
      %23 = dma.done [#allocation3], 16
    $region13: #{tpu_custom_call.1} parent=1 // pred_fallthru
      _
    %v24 = vld [vmem:[#allocation2] sm:$0x1]
    %v25 = vld [vmem:[%s1] sm:$0x1]
    %v26 = vmul.f32 %v24, %v25
    %27 = vst [vmem:[#allocation5] sm:$0x1] %v26
    // Predicated region
    $region14: #{tpu_custom_call.1} parent=1 // pred_check
      _
    $region15: #{tpu_custom_call.1} parent=1 // pred_check_branch
      %29 = sbr.rel (0) target = $region17
    $region16: #{tpu_custom_call.1} parent=1 // pred_region
      %s31 = ssub.s32 16, 16
      %32 = vsyncadd [#allocation4], %s31
      %s34 = sshll.u32 [#allocation5], 4
      %s35 = int_to_ptr.vmem [resolvable:$true] %s34
      %37 = dma.vmem_to_hbm [thread:$0]  %s35, 16, %s2, [#allocation4]
    $region17: #{tpu_custom_call.1} parent=1 // pred_fallthru
      _
    // Predicated region
    $region18: #{tpu_custom_call.1} parent=1 // pred_check
      _
    $region19: #{tpu_custom_call.1} parent=1 // pred_check_branch
      %39 = sbr.rel (0) target = $region21
    $region20: #{tpu_custom_call.1} parent=1 // pred_region
      %40 = dma.done [#allocation4], 16
    $region21: #{tpu_custom_call.1} parent=1 // pred_fallthru
      _
    %41 = vsyncpa [#allocation3], 1
    %42 = vsyncpa [#allocation4], 1

</llo_original>
